<compile_context>
chip_gen: v7x
topology: tpu7x:2x2x1
jax: 0.10.0
libtpu: 0.0.40
codegen_flags: <defaults>
</compile_context>

<pallas_src>
import functools

import jax
import jax.numpy as jnp
from jax import lax
from jax.experimental import pallas as pl
from jax.experimental.pallas import tpu as pltpu

EPS = 1e-5
LANE = 128


def _round_up(n, m):
    return ((n + m - 1) // m) * m


def _bn_train(h, gamma, beta):
    """BatchNorm1d, training mode, fused scale/shift.  h is f32 [B, F]."""
    m = jnp.mean(h, axis=0, keepdims=True)
    d = h - m
    v = jnp.mean(d * d, axis=0, keepdims=True)          # biased variance
    s = gamma * lax.rsqrt(v + EPS)                       # EUP rsqrt, [1, F]
    return d * s + beta                                  # one mul + one add over [B, F]


def _make_encoder_kernel(h1p, h2p, cp):
    """Kernel closed over the static, lane-aligned offsets into the packed slab."""
    o_g1 = 0
    o_be1 = h1p
    o_g2 = 2 * h1p
    o_be2 = 2 * h1p + h2p
    o_b3 = 2 * h1p + 2 * h2p

    def kernel(x_ref, w1_ref, w2_ref, w3_ref, vec_ref, o_ref):
        x = x_ref[...]                                   # bf16 [B, KP]
        g1 = vec_ref[:, o_g1:o_g1 + h1p]                 # static lane-aligned slices
        be1 = vec_ref[:, o_be1:o_be1 + h1p]
        g2 = vec_ref[:, o_g2:o_g2 + h2p]
        be2 = vec_ref[:, o_be2:o_be2 + h2p]
        b3 = vec_ref[:, o_b3:o_b3 + cp]

        # Linear 1 (bias dropped: cancels in the following training-mode BN)
        h1 = jnp.dot(x, w1_ref[...], preferred_element_type=jnp.float32)
        h1 = _bn_train(h1, g1, be1)

        # Linear 2 (bias dropped: cancels in BN)
        h2 = jnp.dot(h1.astype(jnp.bfloat16), w2_ref[...],
                     preferred_element_type=jnp.float32)
        h2 = _bn_train(h2, g2, be2)

        # Linear 3 (bias kept — no BN follows)
        out = jnp.dot(h2.astype(jnp.bfloat16), w3_ref[...],
                      preferred_element_type=jnp.float32) + b3
        o_ref[...] = out.astype(o_ref.dtype)

    return kernel


def prepare_params(params, state_size, num_classes):
    """One-time preprocessing: lane-pad feature axes, cast matmul weights to bf16,
    and pack the five small per-feature vectors into a single f32 slab."""
    h1 = params["w1"].shape[1]          # 180
    h2 = params["w2"].shape[1]          # 360
    kp = _round_up(state_size, LANE)    # 4   -> 128
    h1p = _round_up(h1, LANE)           # 180 -> 256
    h2p = _round_up(h2, LANE)           # 360 -> 384
    cp = _round_up(num_classes, LANE)   # 3   -> 128

    bf16, f32 = jnp.bfloat16, jnp.float32
    w1p = jnp.zeros((kp, h1p), bf16).at[:state_size, :h1].set(params["w1"].astype(bf16))
    w2p = jnp.zeros((h1p, h2p), bf16).at[:h1, :h2].set(params["w2"].astype(bf16))
    w3p = jnp.zeros((h2p, cp), bf16).at[:h2, :num_classes].set(params["w3"].astype(bf16))

    # Packed (1, 2*h1p + 2*h2p + cp) slab: [g1 | be1 | g2 | be2 | b3], lane-aligned.
    vec = jnp.zeros((1, 2 * h1p + 2 * h2p + cp), f32)
    vec = vec.at[:, 0:h1].set(params["g1"])
    vec = vec.at[:, h1p:h1p + h1].set(params["be1"])
    vec = vec.at[:, 2 * h1p:2 * h1p + h2].set(params["g2"])
    vec = vec.at[:, 2 * h1p + h2p:2 * h1p + h2p + h2].set(params["be2"])
    vec = vec.at[:, 2 * h1p + 2 * h2p:2 * h1p + 2 * h2p + num_classes].set(params["b3"])

    return dict(w1p=jax.device_put(w1p), w2p=jax.device_put(w2p),
                w3p=jax.device_put(w3p), vec=jax.device_put(vec))


@functools.partial(jax.jit, static_argnames=("state_size", "num_classes"))
def encoder_forward(x, w1p, w2p, w3p, vec, *, state_size, num_classes):
    """x: [B, state_size] f32.  w*/vec: pre-padded, pre-cast params (prepare_params)."""
    B = x.shape[0]
    assert B > 1, "training-mode BatchNorm1d requires batch > 1"
    kp, h1p = w1p.shape
    h2p = w2p.shape[1]
    cp = w3p.shape[1]

    # Only per-call prep: cast x to bf16 and lane-pad K (tiny: B*kp*2 bytes).
    xp = jnp.zeros((B, kp), jnp.bfloat16).at[:, :state_size].set(x.astype(jnp.bfloat16))

    vmem_spec = pl.BlockSpec(memory_space=pltpu.MemorySpace.VMEM)
    out_padded = pl.pallas_call(
        _make_encoder_kernel(h1p, h2p, cp),
        out_shape=jax.ShapeDtypeStruct((B, cp), jnp.float32),
        in_specs=[vmem_spec] * 5,
        out_specs=vmem_spec,
        compiler_params=pltpu.CompilerParams(vmem_limit_bytes=8 << 20),
    )(xp, w1p, w2p, w3p, vec)

    return out_padded[:, :num_classes]


def init_params(key, state_size, num_classes):
    """Mirrors PyTorch defaults: Linear U(-1/sqrt(fan_in), 1/sqrt(fan_in)),
    BatchNorm1d gamma=1, beta=0.  Linear weights stored pre-transposed (in, out)."""
    ks = jax.random.split(key, 6)

    def linear(kw, kb, fan_in, fan_out):
        bound = 1.0 / jnp.sqrt(fan_in)
        w = jax.random.uniform(kw, (fan_in, fan_out), jnp.float32, -bound, bound)
        b = jax.random.uniform(kb, (1, fan_out), jnp.float32, -bound, bound)
        return w, b

    w1, b1 = linear(ks[0], ks[1], state_size, 180)
    w2, b2 = linear(ks[2], ks[3], 180, 360)
    w3, b3 = linear(ks[4], ks[5], 360, num_classes)

    return dict(
        w1=w1, b1=b1, g1=jnp.ones((1, 180), jnp.float32), be1=jnp.zeros((1, 180), jnp.float32),
        w2=w2, b2=b2, g2=jnp.ones((1, 360), jnp.float32), be2=jnp.zeros((1, 360), jnp.float32),
        w3=w3, b3=b3,
    )


def encoder_ref(x, p):
    """Pure-JAX f32 reference (full PyTorch training-mode semantics, biases included)."""
    h = x @ p["w1"] + p["b1"]
    m = h.mean(0, keepdims=True)
    v = ((h - m) ** 2).mean(0, keepdims=True)
    h = (h - m) / jnp.sqrt(v + EPS) * p["g1"] + p["be1"]
    h = h @ p["w2"] + p["b2"]
    m = h.mean(0, keepdims=True)
    v = ((h - m) ** 2).mean(0, keepdims=True)
    h = (h - m) / jnp.sqrt(v + EPS) * p["g2"] + p["be2"]
    return h @ p["w3"] + p["b3"]


if __name__ == "__main__":
    key = jax.random.PRNGKey(0)
    k_x, k_p = jax.random.split(key)

    batch = 8          # sublane-aligned; BatchNorm1d training mode needs batch > 1
    state_size = 4     # OHLC
    num_classes = 3    # Buy, Sell, Idle

    x = jax.random.normal(k_x, (batch, state_size), jnp.float32)
    params = init_params(k_p, state_size, num_classes)
    prepped = prepare_params(params, state_size, num_classes)   # once, NOT per call

    out = encoder_forward(x, prepped["w1p"], prepped["w2p"], prepped["w3p"],
                          prepped["vec"], state_size=state_size,
                          num_classes=num_classes)
    out = jax.block_until_ready(out)

    ref = encoder_ref(x, params)
    assert out.shape == (batch, num_classes)
    # bf16 matmul operands (f32 accumulation) -> loosened tolerance vs f32 reference.
    max_err = float(jnp.max(jnp.abs(out - ref)))
    assert jnp.allclose(out, ref, atol=5e-2, rtol=5e-2), f"mismatch vs reference (max abs err {max_err})"

    print("KERNEL_OK")
</pallas_src>

<mosaic_0001>
module attributes {stable_mosaic.version = 11 : i64} {
  func.func @kernel(%arg0: memref<8x128xbf16, #tpu.memory_space<vmem>>, %arg1: memref<128x256xbf16, #tpu.memory_space<vmem>>, %arg2: memref<256x384xbf16, #tpu.memory_space<vmem>>, %arg3: memref<384x128xbf16, #tpu.memory_space<vmem>>, %arg4: memref<1x1408xf32, #tpu.memory_space<vmem>>, %arg5: memref<8x128xf32, #tpu.memory_space<vmem>>) attributes {dimension_semantics = [], scalar_prefetch = 0 : i64, scratch_operands = 0 : i64, tpu.core_type = #tpu.core_type<tc>} {
    %c0 = arith.constant 0 : index
    %c0_0 = arith.constant 0 : index
    %0 = vector.load %arg0[%c0, %c0_0] : memref<8x128xbf16, #tpu.memory_space<vmem>>, vector<8x128xbf16>
    %c0_1 = arith.constant 0 : index
    %c0_2 = arith.constant 0 : index
    %1 = vector.load %arg4[%c0_1, %c0_2] : memref<1x1408xf32, #tpu.memory_space<vmem>>, vector<1x256xf32>
    %c0_3 = arith.constant 0 : index
    %c256 = arith.constant 256 : index
    %2 = vector.load %arg4[%c0_3, %c256] : memref<1x1408xf32, #tpu.memory_space<vmem>>, vector<1x256xf32>
    %c0_4 = arith.constant 0 : index
    %c512 = arith.constant 512 : index
    %3 = vector.load %arg4[%c0_4, %c512] : memref<1x1408xf32, #tpu.memory_space<vmem>>, vector<1x384xf32>
    %c0_5 = arith.constant 0 : index
    %c896 = arith.constant 896 : index
    %4 = vector.load %arg4[%c0_5, %c896] : memref<1x1408xf32, #tpu.memory_space<vmem>>, vector<1x384xf32>
    %c0_6 = arith.constant 0 : index
    %c1280 = arith.constant 1280 : index
    %5 = vector.load %arg4[%c0_6, %c1280] : memref<1x1408xf32, #tpu.memory_space<vmem>>, vector<1x128xf32>
    %c0_7 = arith.constant 0 : index
    %c0_8 = arith.constant 0 : index
    %6 = vector.load %arg1[%c0_7, %c0_8] : memref<128x256xbf16, #tpu.memory_space<vmem>>, vector<128x256xbf16>
    %cst = arith.constant dense<0.000000e+00> : vector<8x256xf32>
    %7 = tpu.matmul %0, %6, %cst {dimension_numbers = #tpu.dot_dimension_numbers<[1], [0], [0], [1], [0, 0, 1, 1], [], []>} : vector<8x128xbf16>, vector<128x256xbf16>, vector<8x256xf32> -> vector<8x256xf32>
    %cst_9 = arith.constant dense<0.000000e+00> : vector<256xf32>
    %8 = vector.multi_reduction <add>, %7, %cst_9 [0] : vector<8x256xf32> to vector<256xf32>
    %9 = vector.shape_cast %8 : vector<256xf32> to vector<1x256xf32>
    %cst_10 = arith.constant 8.000000e+00 : f32
    %10 = vector.broadcast %cst_10 : f32 to vector<1x256xf32>
    %11 = arith.divf %9, %10 : vector<1x256xf32>
    %12 = vector.broadcast %11 : vector<1x256xf32> to vector<8x256xf32>
    %13 = arith.subf %7, %12 : vector<8x256xf32>
    %14 = arith.mulf %13, %13 : vector<8x256xf32>
    %cst_11 = arith.constant dense<0.000000e+00> : vector<256xf32>
    %15 = vector.multi_reduction <add>, %14, %cst_11 [0] : vector<8x256xf32> to vector<256xf32>
    %16 = vector.shape_cast %15 : vector<256xf32> to vector<1x256xf32>
    %cst_12 = arith.constant 8.000000e+00 : f32
    %17 = vector.broadcast %cst_12 : f32 to vector<1x256xf32>
    %18 = arith.divf %16, %17 : vector<1x256xf32>
    %cst_13 = arith.constant 9.99999974E-6 : f32
    %19 = vector.broadcast %cst_13 : f32 to vector<1x256xf32>
    %20 = arith.addf %18, %19 : vector<1x256xf32>
    %21 = math.rsqrt %20 : vector<1x256xf32>
    %22 = arith.mulf %1, %21 : vector<1x256xf32>
    %23 = vector.broadcast %22 : vector<1x256xf32> to vector<8x256xf32>
    %24 = arith.mulf %13, %23 : vector<8x256xf32>
    %25 = vector.broadcast %2 : vector<1x256xf32> to vector<8x256xf32>
    %26 = arith.addf %24, %25 : vector<8x256xf32>
    %27 = arith.truncf %26 : vector<8x256xf32> to vector<8x256xbf16>
    %c0_14 = arith.constant 0 : index
    %c0_15 = arith.constant 0 : index
    %28 = vector.load %arg2[%c0_14, %c0_15] : memref<256x384xbf16, #tpu.memory_space<vmem>>, vector<256x384xbf16>
    %cst_16 = arith.constant dense<0.000000e+00> : vector<8x384xf32>
    %29 = tpu.matmul %27, %28, %cst_16 {dimension_numbers = #tpu.dot_dimension_numbers<[1], [0], [0], [1], [0, 0, 1, 1], [], []>} : vector<8x256xbf16>, vector<256x384xbf16>, vector<8x384xf32> -> vector<8x384xf32>
    %cst_17 = arith.constant dense<0.000000e+00> : vector<384xf32>
    %30 = vector.multi_reduction <add>, %29, %cst_17 [0] : vector<8x384xf32> to vector<384xf32>
    %31 = vector.shape_cast %30 : vector<384xf32> to vector<1x384xf32>
    %cst_18 = arith.constant 8.000000e+00 : f32
    %32 = vector.broadcast %cst_18 : f32 to vector<1x384xf32>
    %33 = arith.divf %31, %32 : vector<1x384xf32>
    %34 = vector.broadcast %33 : vector<1x384xf32> to vector<8x384xf32>
    %35 = arith.subf %29, %34 : vector<8x384xf32>
    %36 = arith.mulf %35, %35 : vector<8x384xf32>
    %cst_19 = arith.constant dense<0.000000e+00> : vector<384xf32>
    %37 = vector.multi_reduction <add>, %36, %cst_19 [0] : vector<8x384xf32> to vector<384xf32>
    %38 = vector.shape_cast %37 : vector<384xf32> to vector<1x384xf32>
    %cst_20 = arith.constant 8.000000e+00 : f32
    %39 = vector.broadcast %cst_20 : f32 to vector<1x384xf32>
    %40 = arith.divf %38, %39 : vector<1x384xf32>
    %cst_21 = arith.constant 9.99999974E-6 : f32
    %41 = vector.broadcast %cst_21 : f32 to vector<1x384xf32>
    %42 = arith.addf %40, %41 : vector<1x384xf32>
    %43 = math.rsqrt %42 : vector<1x384xf32>
    %44 = arith.mulf %3, %43 : vector<1x384xf32>
    %45 = vector.broadcast %44 : vector<1x384xf32> to vector<8x384xf32>
    %46 = arith.mulf %35, %45 : vector<8x384xf32>
    %47 = vector.broadcast %4 : vector<1x384xf32> to vector<8x384xf32>
    %48 = arith.addf %46, %47 : vector<8x384xf32>
    %49 = arith.truncf %48 : vector<8x384xf32> to vector<8x384xbf16>
    %c0_22 = arith.constant 0 : index
    %c0_23 = arith.constant 0 : index
    %50 = vector.load %arg3[%c0_22, %c0_23] : memref<384x128xbf16, #tpu.memory_space<vmem>>, vector<384x128xbf16>
    %cst_24 = arith.constant dense<0.000000e+00> : vector<8x128xf32>
    %51 = tpu.matmul %49, %50, %cst_24 {dimension_numbers = #tpu.dot_dimension_numbers<[1], [0], [0], [1], [0, 0, 1, 1], [], []>} : vector<8x384xbf16>, vector<384x128xbf16>, vector<8x128xf32> -> vector<8x128xf32>
    %52 = vector.broadcast %5 : vector<1x128xf32> to vector<8x128xf32>
    %53 = arith.addf %51, %52 : vector<8x128xf32>
    %c0_25 = arith.constant 0 : index
    %c0_26 = arith.constant 0 : index
    %54 = vector.load %arg5[%c0_25, %c0_26] : memref<8x128xf32, #tpu.memory_space<vmem>>, vector<8x128xf32>
    tpu.vector_store %arg5[%c0_25, %c0_26], %53 {strides = array<i32>} : memref<8x128xf32, #tpu.memory_space<vmem>>, vector<8x128xf32>,
    return
  }
}

</mosaic_0001>

<llo_original>
// kernel: encoder_forward.1
$region0: #{encoder_forward.1}
  #allocation0 [shape = 'u32[]', space=smem, size = 0x4, offset = 0x4, fixed_abs, tag = 'smem constant byte address 0x4 - core index']
  #allocation1 [shape = 'u32[144,128]{1,0:T(1,128)}', space=vmem, size = 0x12000, scoped, tag = 'internal scratch']
  %s0 = inlined_call_operand.vmem [shape: bf16[8,128], index: 0, kind: input, shape index: {}]
  %s1 = inlined_call_operand.hbm [shape: bf16[128,256], index: 1, kind: input, shape index: {}]
  %s2 = inlined_call_operand.hbm [shape: bf16[256,384], index: 2, kind: input, shape index: {}]
  %s3 = inlined_call_operand.hbm [shape: bf16[384,128], index: 3, kind: input, shape index: {}]
  %s4 = inlined_call_operand.vmem [shape: f32[1,1408], index: 4, kind: input, shape index: {}]
  %s5 = inlined_call_operand.vmem [shape: f32[8,128], index: 5, kind: output, shape index: {}]
  %s6 = sld [smem:[#allocation0]]
  $region42: #{encoder_forward.1} parent=0
    _
  %s8 = ssub.s32 1, %s6
  %s9 = scalar_select 0, %s8, %s6
  $region1: #{encoder_forward.1} parent=0
    #allocation2 [shape = 'u8[65536]{0}', space=vmem, size = 0x10000, scoped, tag = 'input window, operand 1, single buffered']
    #allocation3 [shape = 's32[1]{0}', space=sflag, size = 0x4, scoped, tag = 'scoped memory for encoder_forward.1']
    #allocation4 [shape = 'u8[196608]{0}', space=vmem, size = 0x30000, scoped, tag = 'input window, operand 2, single buffered']
    #allocation5 [shape = 's32[1]{0}', space=sflag, size = 0x4, scoped, tag = 'scoped memory for encoder_forward.1']
    #allocation6 [shape = 'u8[98304]{0}', space=vmem, size = 0x18000, scoped, tag = 'input window, operand 3, single buffered']
    %10 = vsyncpa [#allocation3], 0
    %11 = vsyncpa [#allocation5], 0
    // Predicated region
    $region2: #{encoder_forward.1} parent=1 // pred_check
      _
    $region3: #{encoder_forward.1} parent=1 // pred_check_branch
      %13 = sbr.rel (0) target = $region5
    $region4: #{encoder_forward.1} parent=1 // pred_region
      _
    $region5: #{encoder_forward.1} parent=1 // pred_fallthru
      _
    // Predicated region
    $region6: #{encoder_forward.1} parent=1 // pred_check
      _
    $region7: #{encoder_forward.1} parent=1 // pred_check_branch
      %15 = sbr.rel (0) target = $region9
    $region8: #{encoder_forward.1} parent=1 // pred_region
      %s17 = ssub.s32 2048, 2048
      %18 = vsyncadd [#allocation3], %s17
      %s19 = sshll.u32 [#allocation2], 4
      %s20 = int_to_ptr.vmem [resolvable:$true] %s19
      %25 = dma.hbm_to_vmem [thread:$0]  %s1, 2048, %s20, [#allocation3], 128, 128, 8
    $region9: #{encoder_forward.1} parent=1 // pred_fallthru
      _
    // Predicated region
    $region10: #{encoder_forward.1} parent=1 // pred_check
      _
    $region11: #{encoder_forward.1} parent=1 // pred_check_branch
      %27 = sbr.rel (0) target = $region13
    $region12: #{encoder_forward.1} parent=1 // pred_region
      %s29 = ssub.s32 6144, 6144
      %30 = vsyncadd [#allocation5], %s29
      %s31 = sshll.u32 [#allocation4], 4
      %s32 = int_to_ptr.vmem [resolvable:$true] %s31
      %37 = dma.hbm_to_vmem [thread:$0]  %s2, 6144, %s32, [#allocation5], 192, 192, 12
    $region13: #{encoder_forward.1} parent=1 // pred_fallthru
      _
    // Predicated region
    $region14: #{encoder_forward.1} parent=1 // pred_check
      _
    $region15: #{encoder_forward.1} parent=1 // pred_check_branch
      %39 = sbr.rel (0) target = $region17
    $region16: #{encoder_forward.1} parent=1 // pred_region
      %s41 = ssub.s32 3072, 3072
      %42 = vsyncadd [#allocation5], %s41
      %s43 = sshll.u32 [#allocation6], 4
      %s44 = int_to_ptr.vmem [resolvable:$true] %s43
      %49 = dma.hbm_to_vmem [thread:$0]  %s3, 3072, %s44, [#allocation5], 64, 64, 4
    $region17: #{encoder_forward.1} parent=1 // pred_fallthru
      _
    // Predicated region
    $region18: #{encoder_forward.1} parent=1 // pred_check
      _
    $region19: #{encoder_forward.1} parent=1 // pred_check_branch
      %51 = sbr.rel (0) target = $region21
    $region20: #{encoder_forward.1} parent=1 // pred_region
      _
    $region21: #{encoder_forward.1} parent=1 // pred_fallthru
      _
    // Predicated region
    $region22: #{encoder_forward.1} parent=1 // pred_check
      _
    $region23: #{encoder_forward.1} parent=1 // pred_check_branch
      %53 = sbr.rel (0) target = $region25
    $region24: #{encoder_forward.1} parent=1 // pred_region
      %54 = dma.done [#allocation3], 2048
    $region25: #{encoder_forward.1} parent=1 // pred_fallthru
      _
    // Predicated region
    $region26: #{encoder_forward.1} parent=1 // pred_check
      _
    $region27: #{encoder_forward.1} parent=1 // pred_check_branch
      %56 = sbr.rel (0) target = $region29
    $region28: #{encoder_forward.1} parent=1 // pred_region
      %57 = dma.done [#allocation5], 6144
    $region29: #{encoder_forward.1} parent=1 // pred_fallthru
      _
    // Predicated region
    $region30: #{encoder_forward.1} parent=1 // pred_check
      _
    $region31: #{encoder_forward.1} parent=1 // pred_check_branch
      %59 = sbr.rel (0) target = $region33
    $region32: #{encoder_forward.1} parent=1 // pred_region
      %60 = dma.done [#allocation5], 3072
    $region33: #{encoder_forward.1} parent=1 // pred_fallthru
      _
    %v62 = vld [vmem:[%s0] sm:$0xf]
    %v63 = vld [vmem:[%s4] sm:$0x3]
    %v64 = vld [vmem:[%s4 + $0x2] sm:$0x3]
    %v65 = vld [vmem:[%s4 + $0x4] sm:$0x7]
    %v66 = vld [vmem:[%s4 + $0x7] sm:$0x7]
    %v67 = vld [vmem:[%s4 + $0xa] sm:$0x1]
    %v68 = vld [vmem:[#allocation2] sm:$0xff]
    %v69 = vld [vmem:[#allocation2 + $0x8] sm:$0xff]
    %v70 = vld [vmem:[#allocation2 + $0x10] sm:$0xff]
    %v71 = vld [vmem:[#allocation2 + $0x18] sm:$0xff]
    %v72 = vld [vmem:[#allocation2 + $0x20] sm:$0xff]
    %v73 = vld [vmem:[#allocation2 + $0x28] sm:$0xff]
    %v74 = vld [vmem:[#allocation2 + $0x30] sm:$0xff]
    %v75 = vld [vmem:[#allocation2 + $0x38] sm:$0xff]
    %v76 = vld [vmem:[#allocation2 + $0x40] sm:$0xff]
    %v77 = vld [vmem:[#allocation2 + $0x48] sm:$0xff]
    %v78 = vld [vmem:[#allocation2 + $0x50] sm:$0xff]
    %v79 = vld [vmem:[#allocation2 + $0x58] sm:$0xff]
    %v80 = vld [vmem:[#allocation2 + $0x60] sm:$0xff]
    %v81 = vld [vmem:[#allocation2 + $0x68] sm:$0xff]
    %v82 = vld [vmem:[#allocation2 + $0x70] sm:$0xff]
    %v83 = vld [vmem:[#allocation2 + $0x78] sm:$0xff]
    %v100 = vunpack.c.l.b16 %v68
    %v101 = vunpack.c.h.b16 %v68
    %v102 = vunpack.c.l.b16 %v69
    %v103 = vunpack.c.h.b16 %v69
    %v104 = vunpack.c.l.b16 %v70
    %v105 = vunpack.c.h.b16 %v70
    %v106 = vunpack.c.l.b16 %v71
    %v107 = vunpack.c.h.b16 %v71
    %v108 = vunpack.c.l.b16 %v72
    %v109 = vunpack.c.h.b16 %v72
    %v110 = vunpack.c.l.b16 %v73
    %v111 = vunpack.c.h.b16 %v73
    %v112 = vunpack.c.l.b16 %v74
    %v113 = vunpack.c.h.b16 %v74
    %v114 = vunpack.c.l.b16 %v75
    %v115 = vunpack.c.h.b16 %v75
    %v116 = vunpack.c.l.b16 %v76
    %v117 = vunpack.c.h.b16 %v76
    %v118 = vunpack.c.l.b16 %v77
    %v119 = vunpack.c.h.b16 %v77
    %v120 = vunpack.c.l.b16 %v78
    %v121 = vunpack.c.h.b16 %v78
    %v122 = vunpack.c.l.b16 %v79
    %v123 = vunpack.c.h.b16 %v79
    %v124 = vunpack.c.l.b16 %v80
    %v125 = vunpack.c.h.b16 %v80
    %v126 = vunpack.c.l.b16 %v81
    %v127 = vunpack.c.h.b16 %v81
    %v128 = vunpack.c.l.b16 %v82
    %v129 = vunpack.c.h.b16 %v82
    %v130 = vunpack.c.l.b16 %v83
    %v131 = vunpack.c.h.b16 %v83
    %v132 = vpack.c.b16 %v102, %v100
    %v133 = vpack.c.b16 %v103, %v101
    %v134 = vpack.c.b16 %v106, %v104
    %v135 = vpack.c.b16 %v107, %v105
    %v136 = vpack.c.b16 %v110, %v108
    %v137 = vpack.c.b16 %v111, %v109
    %v138 = vpack.c.b16 %v114, %v112
    %v139 = vpack.c.b16 %v115, %v113
    %v140 = vpack.c.b16 %v118, %v116
    %v141 = vpack.c.b16 %v119, %v117
    %v142 = vpack.c.b16 %v122, %v120
    %v143 = vpack.c.b16 %v123, %v121
    %v144 = vpack.c.b16 %v126, %v124
    %v145 = vpack.c.b16 %v127, %v125
    %v146 = vpack.c.b16 %v130, %v128
    %v147 = vpack.c.b16 %v131, %v129
    %164 = vmatprep.subr.bf16.mxu0 %v133
    %165 = vmatpush1.bf16.msra.mxu0 %v132
    %166 = vmatprep.subr.bf16.mxu0 %v135
    %167 = vmatpush1.bf16.msra.mxu0 %v134
    %168 = vmatprep.subr.bf16.mxu0 %v137
    %169 = vmatpush1.bf16.msra.mxu0 %v136
    %170 = vmatprep.subr.bf16.mxu0 %v139
    %171 = vmatpush1.bf16.msra.mxu0 %v138
    %172 = vmatprep.subr.bf16.mxu0 %v141
    %173 = vmatpush1.bf16.msra.mxu0 %v140
    %174 = vmatprep.subr.bf16.mxu0 %v143
    %175 = vmatpush1.bf16.msra.mxu0 %v142
    %176 = vmatprep.subr.bf16.mxu0 %v145
    %177 = vmatpush1.bf16.msra.mxu0 %v144
    %178 = vmatprep.subr.bf16.mxu0 %v147
    %179 = vmatpush1.bf16.msra.mxu0 %v146
    %180 = vmatprep.subr.bf16.mxu0 0
    %181 = vmatpush1.bf16.msra.mxu0 0
    %182 = vmatprep.subr.bf16.mxu0 0
    %183 = vmatpush1.bf16.msra.mxu0 0
    %184 = vmatprep.subr.bf16.mxu0 0
    %185 = vmatpush1.bf16.msra.mxu0 0
    %186 = vmatprep.subr.bf16.mxu0 0
    %187 = vmatpush1.bf16.msra.mxu0 0
    %188 = vmatprep.subr.bf16.mxu0 0
    %189 = vmatpush1.bf16.msra.mxu0 0
    %190 = vmatprep.subr.bf16.mxu0 0
    %191 = vmatpush1.bf16.msra.mxu0 0
    %192 = vmatprep.subr.bf16.mxu0 0
    %193 = vmatpush1.bf16.msra.mxu0 0
    %194 = vmatprep.subr.bf16.mxu0 0
    %195 = vmatpush1.bf16.msra.mxu0 0
    %196 = vmatprep.mubr.bf16.mxu0 0
    %197 = vmatmul.mubr.bf16.gmra.mrb[0].mxu0 %v62
    %v198 = vpop.f32.mrb[0].mxu0
    %v199 = vadd.f32 0.0, %v198
    %v200 = vpop.f32.mrb[0].mxu0
    %v201 = vadd.f32 0.0, %v200
    %v202 = vpop.f32.mrb[0].mxu0
    %v203 = vpop.f32.mrb[0].mxu0
    %204 = vdwg.mxu0
    %v205 = vrot.slane %v199, 4
    %v206 = vadd.f32 %v199, %v205
    %v207 = vrot.slane %v206, 2
    %v208 = vadd.f32 %v206, %v207
    %v209 = vrot.slane %v208, 1
    %v210 = vadd.f32 %v208, %v209
    %v211 = vrot.slane %v201, 4
    %v212 = vadd.f32 %v201, %v211
    %v213 = vrot.slane %v212, 2
    %v214 = vadd.f32 %v212, %v213
    %v215 = vrot.slane %v214, 1
    %v216 = vadd.f32 %v214, %v215
    %v217 = vrcp.pop 8.0
    %v218 = vmul.f32 %v210, %v217
    %v219 = vmul.f32 %v216, %v217
    %v220 = vsub.f32 %v199, %v218
    %v221 = vsub.f32 %v201, %v219
    %v222 = vmul.f32 %v220, %v220
    %v223 = vmul.f32 %v221, %v221
    %v224 = vrot.slane %v222, 4
    %v225 = vadd.f32 %v222, %v224
    %v226 = vrot.slane %v225, 2
    %v227 = vadd.f32 %v225, %v226
    %v228 = vrot.slane %v227, 1
    %v229 = vadd.f32 %v227, %v228
    %v230 = vrot.slane %v223, 4
    %v231 = vadd.f32 %v223, %v230
    %v232 = vrot.slane %v231, 2
    %v233 = vadd.f32 %v231, %v232
    %v234 = vrot.slane %v233, 1
    %v235 = vadd.f32 %v233, %v234
    %v236 = vmul.f32 %v229, %v217
    %v237 = vmul.f32 %v235, %v217
    %v238 = vadd.f32 %v236, 1e-05
    %v239 = vadd.f32 %v237, 1e-05
    %v240 = vrsqrt.pop %v238
    %v241 = vrsqrt.pop %v239
    %v244 = vcombine.low %v240, %v241
    %v246 = vunpack.c.l.s4 1966171168
    %v247 = vunpack.c.0.s8 %v246
    %v248 = vlaneseq
    %v249 = vshrl.u32 %v248, 7
    %v250 = vsub.s32 %v247, %v249
    %v251 = vrot.slane %v244, %v250
    %v253 = vunpack.c.l.s4 1966171168
    %v254 = vunpack.c.0.s8 %v253
    %v255 = vlaneseq
    %v256 = vshrl.u32 %v255, 7
    %v257 = vsub.s32 %v254, %v256
    %v258 = vrot.slane %v251, %v257
    %v260 = vmul.f32 %v63, %v258
    %v262 = vlaneseq
    %v263 = vshrl.u32 %v262, 7
    %v264 = vsub.s32 0, %v263
    %v265 = vrot.slane %v260, %v264
    %v266 = vlaneseq
    %v267 = vshrl.u32 %v266, 7
    %v268 = vsub.s32 1, %v267
    %v269 = vrot.slane %v260, %v268
    %v272 = vmul.f32 %v220, %v265
    %v273 = vmul.f32 %v221, %v269
    %v275 = vlaneseq
    %v276 = vshrl.u32 %v275, 7
    %v277 = vsub.s32 0, %v276
    %v278 = vrot.slane %v64, %v277
    %v279 = vlaneseq
    %v280 = vshrl.u32 %v279, 7
    %v281 = vsub.s32 1, %v280
    %v282 = vrot.slane %v64, %v281
    %v285 = vadd.f32 %v272, %v278
    %v286 = vadd.f32 %v273, %v282
    %v287 = vpack.c.bf16 %v285, %v285
    %v288 = vpack.c.bf16 %v286, %v286
    %v289 = vld [vmem:[#allocation4] sm:$0xff]
    %v290 = vld [vmem:[#allocation4 + $0x8] sm:$0xf]
    %v291 = vld [vmem:[#allocation4 + $0xc] sm:$0xff]
    %v292 = vld [vmem:[#allocation4 + $0x14] sm:$0xf]
    %v293 = vld [vmem:[#allocation4 + $0x18] sm:$0xff]
    %v294 = vld [vmem:[#allocation4 + $0x20] sm:$0xf]
    %v295 = vld [vmem:[#allocation4 + $0x24] sm:$0xff]
    %v296 = vld [vmem:[#allocation4 + $0x2c] sm:$0xf]
    %v297 = vld [vmem:[#allocation4 + $0x30] sm:$0xff]
    %v298 = vld [vmem:[#allocation4 + $0x38] sm:$0xf]
    %v299 = vld [vmem:[#allocation4 + $0x3c] sm:$0xff]
    %v300 = vld [vmem:[#allocation4 + $0x44] sm:$0xf]
    %v301 = vld [vmem:[#allocation4 + $0x48] sm:$0xff]
    %v302 = vld [vmem:[#allocation4 + $0x50] sm:$0xf]
    %v303 = vld [vmem:[#allocation4 + $0x54] sm:$0xff]
    %v304 = vld [vmem:[#allocation4 + $0x5c] sm:$0xf]
    %v305 = vld [vmem:[#allocation4 + $0x60] sm:$0xff]
    %v306 = vld [vmem:[#allocation4 + $0x68] sm:$0xf]
    %v307 = vld [vmem:[#allocation4 + $0x6c] sm:$0xff]
    %v308 = vld [vmem:[#allocation4 + $0x74] sm:$0xf]
    %v309 = vld [vmem:[#allocation4 + $0x78] sm:$0xff]
    %v310 = vld [vmem:[#allocation4 + $0x80] sm:$0xf]
    %v311 = vld [vmem:[#allocation4 + $0x84] sm:$0xff]
    %v312 = vld [vmem:[#allocation4 + $0x8c] sm:$0xf]
    %v313 = vld [vmem:[#allocation4 + $0x90] sm:$0xff]
    %v314 = vld [vmem:[#allocation4 + $0x98] sm:$0xf]
    %v315 = vld [vmem:[#allocation4 + $0x9c] sm:$0xff]
    %v316 = vld [vmem:[#allocation4 + $0xa4] sm:$0xf]
    %v317 = vld [vmem:[#allocation4 + $0xa8] sm:$0xff]
    %v318 = vld [vmem:[#allocation4 + $0xb0] sm:$0xf]
    %v319 = vld [vmem:[#allocation4 + $0xb4] sm:$0xff]
    %v320 = vld [vmem:[#allocation4 + $0xbc] sm:$0xf]
    %v321 = vld [vmem:[#allocation4 + $0xc0] sm:$0xff]
    %v322 = vld [vmem:[#allocation4 + $0xc8] sm:$0xf]
    %v323 = vld [vmem:[#allocation4 + $0xcc] sm:$0xff]
    %v324 = vld [vmem:[#allocation4 + $0xd4] sm:$0xf]
    %v325 = vld [vmem:[#allocation4 + $0xd8] sm:$0xff]
    %v326 = vld [vmem:[#allocation4 + $0xe0] sm:$0xf]
    %v327 = vld [vmem:[#allocation4 + $0xe4] sm:$0xff]
    %v328 = vld [vmem:[#allocation4 + $0xec] sm:$0xf]
    %v329 = vld [vmem:[#allocation4 + $0xf0] sm:$0xff]
    %v330 = vld [vmem:[#allocation4 + $0xf8] sm:$0xf]
    %v331 = vld [vmem:[#allocation4 + $0xfc] sm:$0xff]
    %v332 = vld [vmem:[#allocation4 + $0x104] sm:$0xf]
    %v333 = vld [vmem:[#allocation4 + $0x108] sm:$0xff]
    %v334 = vld [vmem:[#allocation4 + $0x110] sm:$0xf]
    %v335 = vld [vmem:[#allocation4 + $0x114] sm:$0xff]
    %v336 = vld [vmem:[#allocation4 + $0x11c] sm:$0xf]
    %v337 = vld [vmem:[#allocation4 + $0x120] sm:$0xff]
    %v338 = vld [vmem:[#allocation4 + $0x128] sm:$0xf]
    %v339 = vld [vmem:[#allocation4 + $0x12c] sm:$0xff]
    %v340 = vld [vmem:[#allocation4 + $0x134] sm:$0xf]
    %v341 = vld [vmem:[#allocation4 + $0x138] sm:$0xff]
    %v342 = vld [vmem:[#allocation4 + $0x140] sm:$0xf]
    %v343 = vld [vmem:[#allocation4 + $0x144] sm:$0xff]
    %v344 = vld [vmem:[#allocation4 + $0x14c] sm:$0xf]
    %v345 = vld [vmem:[#allocation4 + $0x150] sm:$0xff]
    %v346 = vld [vmem:[#allocation4 + $0x158] sm:$0xf]
    %v347 = vld [vmem:[#allocation4 + $0x15c] sm:$0xff]
    %v348 = vld [vmem:[#allocation4 + $0x164] sm:$0xf]
    %v349 = vld [vmem:[#allocation4 + $0x168] sm:$0xff]
    %v350 = vld [vmem:[#allocation4 + $0x170] sm:$0xf]
    %v351 = vld [vmem:[#allocation4 + $0x174] sm:$0xff]
    %v352 = vld [vmem:[#allocation4 + $0x17c] sm:$0xf]
    %v417 = vunpack.c.l.b16 %v289
    %v418 = vunpack.c.h.b16 %v289
    %v419 = vunpack.c.l.b16 %v290
    %v420 = vunpack.c.l.b16 %v291
    %v421 = vunpack.c.h.b16 %v291
    %v422 = vunpack.c.l.b16 %v292
    %v423 = vunpack.c.l.b16 %v293
    %v424 = vunpack.c.h.b16 %v293
    %v425 = vunpack.c.l.b16 %v294
    %v426 = vunpack.c.l.b16 %v295
    %v427 = vunpack.c.h.b16 %v295
    %v428 = vunpack.c.l.b16 %v296
    %v429 = vunpack.c.l.b16 %v297
    %v430 = vunpack.c.h.b16 %v297
    %v431 = vunpack.c.l.b16 %v298
    %v432 = vunpack.c.l.b16 %v299
    %v433 = vunpack.c.h.b16 %v299
    %v434 = vunpack.c.l.b16 %v300
    %v435 = vunpack.c.l.b16 %v301
    %v436 = vunpack.c.h.b16 %v301
    %v437 = vunpack.c.l.b16 %v302
    %v438 = vunpack.c.l.b16 %v303
    %v439 = vunpack.c.h.b16 %v303
    %v440 = vunpack.c.l.b16 %v304
    %v441 = vunpack.c.l.b16 %v305
    %v442 = vunpack.c.h.b16 %v305
    %v443 = vunpack.c.l.b16 %v306
    %v444 = vunpack.c.l.b16 %v307
    %v445 = vunpack.c.h.b16 %v307
    %v446 = vunpack.c.l.b16 %v308
    %v447 = vunpack.c.l.b16 %v309
    %v448 = vunpack.c.h.b16 %v309
    %v449 = vunpack.c.l.b16 %v310
    %v450 = vunpack.c.l.b16 %v311
    %v451 = vunpack.c.h.b16 %v311
    %v452 = vunpack.c.l.b16 %v312
    %v453 = vunpack.c.l.b16 %v313
    %v454 = vunpack.c.h.b16 %v313
    %v455 = vunpack.c.l.b16 %v314
    %v456 = vunpack.c.l.b16 %v315
    %v457 = vunpack.c.h.b16 %v315
    %v458 = vunpack.c.l.b16 %v316
    %v459 = vunpack.c.l.b16 %v317
    %v460 = vunpack.c.h.b16 %v317
    %v461 = vunpack.c.l.b16 %v318
    %v462 = vunpack.c.l.b16 %v319
    %v463 = vunpack.c.h.b16 %v319
    %v464 = vunpack.c.l.b16 %v320
    %v465 = vunpack.c.l.b16 %v321
    %v466 = vunpack.c.h.b16 %v321
    %v467 = vunpack.c.l.b16 %v322
    %v468 = vunpack.c.l.b16 %v323
    %v469 = vunpack.c.h.b16 %v323
    %v470 = vunpack.c.l.b16 %v324
    %v471 = vunpack.c.l.b16 %v325
    %v472 = vunpack.c.h.b16 %v325
    %v473 = vunpack.c.l.b16 %v326
    %v474 = vunpack.c.l.b16 %v327
    %v475 = vunpack.c.h.b16 %v327
    %v476 = vunpack.c.l.b16 %v328
    %v477 = vunpack.c.l.b16 %v329
    %v478 = vunpack.c.h.b16 %v329
    %v479 = vunpack.c.l.b16 %v330
    %v480 = vunpack.c.l.b16 %v331
    %v481 = vunpack.c.h.b16 %v331
    %v482 = vunpack.c.l.b16 %v332
    %v483 = vunpack.c.l.b16 %v333
    %v484 = vunpack.c.h.b16 %v333
    %v485 = vunpack.c.l.b16 %v334
    %v486 = vunpack.c.l.b16 %v335
    %v487 = vunpack.c.h.b16 %v335
    %v488 = vunpack.c.l.b16 %v336
    %v489 = vunpack.c.l.b16 %v337
    %v490 = vunpack.c.h.b16 %v337
    %v491 = vunpack.c.l.b16 %v338
    %v492 = vunpack.c.l.b16 %v339
    %v493 = vunpack.c.h.b16 %v339
    %v494 = vunpack.c.l.b16 %v340
    %v495 = vunpack.c.l.b16 %v341
    %v496 = vunpack.c.h.b16 %v341
    %v497 = vunpack.c.l.b16 %v342
    %v498 = vunpack.c.l.b16 %v343
    %v499 = vunpack.c.h.b16 %v343
    %v500 = vunpack.c.l.b16 %v344
    %v501 = vunpack.c.l.b16 %v345
    %v502 = vunpack.c.h.b16 %v345
    %v503 = vunpack.c.l.b16 %v346
    %v504 = vunpack.c.l.b16 %v347
    %v505 = vunpack.c.h.b16 %v347
    %v506 = vunpack.c.l.b16 %v348
    %v507 = vunpack.c.l.b16 %v349
    %v508 = vunpack.c.h.b16 %v349
    %v509 = vunpack.c.l.b16 %v350
    %v510 = vunpack.c.l.b16 %v351
    %v511 = vunpack.c.h.b16 %v351
    %v512 = vunpack.c.l.b16 %v352
    %v513 = vpack.c.b16 %v420, %v417
    %v514 = vpack.c.b16 %v421, %v418
    %v515 = vpack.c.b16 %v422, %v419
    %v516 = vpack.c.b16 %v426, %v423
    %v517 = vpack.c.b16 %v427, %v424
    %v518 = vpack.c.b16 %v428, %v425
    %v519 = vpack.c.b16 %v432, %v429
    %v520 = vpack.c.b16 %v433, %v430
    %v521 = vpack.c.b16 %v434, %v431
    %v522 = vpack.c.b16 %v438, %v435
    %v523 = vpack.c.b16 %v439, %v436
    %v524 = vpack.c.b16 %v440, %v437
    %v525 = vpack.c.b16 %v444, %v441
    %v526 = vpack.c.b16 %v445, %v442
    %v527 = vpack.c.b16 %v446, %v443
    %v528 = vpack.c.b16 %v450, %v447
    %v529 = vpack.c.b16 %v451, %v448
    %v530 = vpack.c.b16 %v452, %v449
    %v531 = vpack.c.b16 %v456, %v453
    %v532 = vpack.c.b16 %v457, %v454
    %v533 = vpack.c.b16 %v458, %v455
    %v534 = vpack.c.b16 %v462, %v459
    %v535 = vpack.c.b16 %v463, %v460
    %v536 = vpack.c.b16 %v464, %v461
    %v537 = vpack.c.b16 %v468, %v465
    %v538 = vpack.c.b16 %v469, %v466
    %v539 = vpack.c.b16 %v470, %v467
    %v540 = vpack.c.b16 %v474, %v471
    %v541 = vpack.c.b16 %v475, %v472
    %v542 = vpack.c.b16 %v476, %v473
    %v543 = vpack.c.b16 %v480, %v477
    %v544 = vpack.c.b16 %v481, %v478
    %v545 = vpack.c.b16 %v482, %v479
    %v546 = vpack.c.b16 %v486, %v483
    %v547 = vpack.c.b16 %v487, %v484
    %v548 = vpack.c.b16 %v488, %v485
    %v549 = vpack.c.b16 %v492, %v489
    %v550 = vpack.c.b16 %v493, %v490
    %v551 = vpack.c.b16 %v494, %v491
    %v552 = vpack.c.b16 %v498, %v495
    %v553 = vpack.c.b16 %v499, %v496
    %v554 = vpack.c.b16 %v500, %v497
    %v555 = vpack.c.b16 %v504, %v501
    %v556 = vpack.c.b16 %v505, %v502
    %v557 = vpack.c.b16 %v506, %v503
    %v558 = vpack.c.b16 %v510, %v507
    %v559 = vpack.c.b16 %v511, %v508
    %v560 = vpack.c.b16 %v512, %v509
    %609 = vmatprep.subr.bf16.mxu0 %v514
    %610 = vmatpush1.bf16.msra.mxu0 %v513
    %611 = vmatprep.subr.bf16.mxu0 %v517
    %612 = vmatpush1.bf16.msra.mxu0 %v516
    %613 = vmatprep.subr.bf16.mxu0 %v520
    %614 = vmatpush1.bf16.msra.mxu0 %v519
    %615 = vmatprep.subr.bf16.mxu0 %v523
    %616 = vmatpush1.bf16.msra.mxu0 %v522
    %617 = vmatprep.subr.bf16.mxu0 %v526
    %618 = vmatpush1.bf16.msra.mxu0 %v525
    %619 = vmatprep.subr.bf16.mxu0 %v529
    %620 = vmatpush1.bf16.msra.mxu0 %v528
    %621 = vmatprep.subr.bf16.mxu0 %v532
    %622 = vmatpush1.bf16.msra.mxu0 %v531
    %623 = vmatprep.subr.bf16.mxu0 %v535
    %624 = vmatpush1.bf16.msra.mxu0 %v534
    %625 = vmatprep.subr.bf16.mxu0 %v538
    %626 = vmatpush1.bf16.msra.mxu0 %v537
    %627 = vmatprep.subr.bf16.mxu0 %v541
    %628 = vmatpush1.bf16.msra.mxu0 %v540
    %629 = vmatprep.subr.bf16.mxu0 %v544
    %630 = vmatpush1.bf16.msra.mxu0 %v543
    %631 = vmatprep.subr.bf16.mxu0 %v547
    %632 = vmatpush1.bf16.msra.mxu0 %v546
    %633 = vmatprep.subr.bf16.mxu0 %v550
    %634 = vmatpush1.bf16.msra.mxu0 %v549
    %635 = vmatprep.subr.bf16.mxu0 %v553
    %636 = vmatpush1.bf16.msra.mxu0 %v552
    %637 = vmatprep.subr.bf16.mxu0 %v556
    %638 = vmatpush1.bf16.msra.mxu0 %v555
    %639 = vmatprep.subr.bf16.mxu0 %v559
    %640 = vmatpush1.bf16.msra.mxu0 %v558
    %641 = vmatprep.mubr.bf16.mxu0 %v288
    %642 = vmatmul.mubr.bf16.gmra.mrb[0].mxu0 %v287
    %v643 = vpop.f32.mrb[0].mxu0
    %v644 = vadd.f32 0.0, %v643
    %v645 = vpop.f32.mrb[0].mxu0
    %v646 = vadd.f32 0.0, %v645
    %v647 = vpop.f32.mrb[0].mxu0
    %v648 = vpop.f32.mrb[0].mxu0
    %649 = vdwg.mxu0
    %650 = vmatprep.subr.bf16.mxu0 0
    %651 = vmatpush1.bf16.msra.mxu0 %v515
    %652 = vmatprep.subr.bf16.mxu0 0
    %653 = vmatpush1.bf16.msra.mxu0 %v518
    %654 = vmatprep.subr.bf16.mxu0 0
    %655 = vmatpush1.bf16.msra.mxu0 %v521
    %656 = vmatprep.subr.bf16.mxu0 0
    %657 = vmatpush1.bf16.msra.mxu0 %v524
    %658 = vmatprep.subr.bf16.mxu0 0
    %659 = vmatpush1.bf16.msra.mxu0 %v527
    %660 = vmatprep.subr.bf16.mxu0 0
    %661 = vmatpush1.bf16.msra.mxu0 %v530
    %662 = vmatprep.subr.bf16.mxu0 0
    %663 = vmatpush1.bf16.msra.mxu0 %v533
    %664 = vmatprep.subr.bf16.mxu0 0
    %665 = vmatpush1.bf16.msra.mxu0 %v536
    %666 = vmatprep.subr.bf16.mxu0 0
    %667 = vmatpush1.bf16.msra.mxu0 %v539
    %668 = vmatprep.subr.bf16.mxu0 0
    %669 = vmatpush1.bf16.msra.mxu0 %v542
    %670 = vmatprep.subr.bf16.mxu0 0
    %671 = vmatpush1.bf16.msra.mxu0 %v545
    %672 = vmatprep.subr.bf16.mxu0 0
    %673 = vmatpush1.bf16.msra.mxu0 %v548
    %674 = vmatprep.subr.bf16.mxu0 0
    %675 = vmatpush1.bf16.msra.mxu0 %v551
    %676 = vmatprep.subr.bf16.mxu0 0
    %677 = vmatpush1.bf16.msra.mxu0 %v554
    %678 = vmatprep.subr.bf16.mxu0 0
    %679 = vmatpush1.bf16.msra.mxu0 %v557
    %680 = vmatprep.subr.bf16.mxu0 0
    %681 = vmatpush1.bf16.msra.mxu0 %v560
    %682 = vmatprep.mubr.bf16.mxu0 %v288
    %683 = vmatmul.mubr.bf16.gmra.mrb[0].mxu0 %v287
    %v684 = vpop.f32.mrb[0].mxu0
    %v685 = vadd.f32 0.0, %v684
    %v686 = vpop.f32.mrb[0].mxu0
    %v687 = vpop.f32.mrb[0].mxu0
    %v688 = vpop.f32.mrb[0].mxu0
    %689 = vdwg.mxu0
    %v690 = vrot.slane %v644, 4
    %v691 = vadd.f32 %v644, %v690
    %v692 = vrot.slane %v691, 2
    %v693 = vadd.f32 %v691, %v692
    %v694 = vrot.slane %v693, 1
    %v695 = vadd.f32 %v693, %v694
    %v696 = vrot.slane %v646, 4
    %v697 = vadd.f32 %v646, %v696
    %v698 = vrot.slane %v697, 2
    %v699 = vadd.f32 %v697, %v698
    %v700 = vrot.slane %v699, 1
    %v701 = vadd.f32 %v699, %v700
    %v702 = vrot.slane %v685, 4
    %v703 = vadd.f32 %v685, %v702
    %v704 = vrot.slane %v703, 2
    %v705 = vadd.f32 %v703, %v704
    %v706 = vrot.slane %v705, 1
    %v707 = vadd.f32 %v705, %v706
    %v708 = vmul.f32 %v695, %v217
    %v709 = vmul.f32 %v701, %v217
    %v710 = vmul.f32 %v707, %v217
    %v711 = vsub.f32 %v644, %v708
    %v712 = vsub.f32 %v646, %v709
    %v713 = vsub.f32 %v685, %v710
    %v714 = vmul.f32 %v711, %v711
    %v715 = vmul.f32 %v712, %v712
    %v716 = vmul.f32 %v713, %v713
    %v717 = vrot.slane %v714, 4
    %v718 = vadd.f32 %v714, %v717
    %v719 = vrot.slane %v718, 2
    %v720 = vadd.f32 %v718, %v719
    %v721 = vrot.slane %v720, 1
    %v722 = vadd.f32 %v720, %v721
    %v723 = vrot.slane %v715, 4
    %v724 = vadd.f32 %v715, %v723
    %v725 = vrot.slane %v724, 2
    %v726 = vadd.f32 %v724, %v725
    %v727 = vrot.slane %v726, 1
    %v728 = vadd.f32 %v726, %v727
    %v729 = vrot.slane %v716, 4
    %v730 = vadd.f32 %v716, %v729
    %v731 = vrot.slane %v730, 2
    %v732 = vadd.f32 %v730, %v731
    %v733 = vrot.slane %v732, 1
    %v734 = vadd.f32 %v732, %v733
    %v735 = vmul.f32 %v722, %v217
    %v736 = vmul.f32 %v728, %v217
    %v737 = vmul.f32 %v734, %v217
    %v738 = vadd.f32 %v735, 1e-05
    %v739 = vadd.f32 %v736, 1e-05
    %v740 = vadd.f32 %v737, 1e-05
    %v741 = vrsqrt.pop %v738
    %v742 = vrsqrt.pop %v739
    %v743 = vrsqrt.pop %v740
    %v747 = vcombine.low %v741, %v742
    %v749 = vunpack.c.l.s4 1966171168
    %v750 = vunpack.c.0.s8 %v749
    %v751 = vlaneseq
    %v752 = vshrl.u32 %v751, 7
    %v753 = vsub.s32 %v750, %v752
    %v754 = vrot.slane %v747, %v753
    %v756 = vunpack.c.l.s4 1966171168
    %v757 = vunpack.c.0.s8 %v756
    %v758 = vlaneseq
    %v759 = vshrl.u32 %v758, 7
    %v760 = vsub.s32 %v757, %v759
    %v761 = vrot.slane %v743, %v760
    %v762 = vcombine.low %v754, %v761
    %v764 = vunpack.c.l.s4 1966171168
    %v765 = vunpack.c.0.s8 %v764
    %v766 = vlaneseq
    %v767 = vshrl.u32 %v766, 7
    %v768 = vsub.s32 %v765, %v767
    %v769 = vrot.slane %v762, %v768
    %v771 = vmul.f32 %v65, %v769
    %v773 = vlaneseq
    %v774 = vshrl.u32 %v773, 7
    %v775 = vsub.s32 0, %v774
    %v776 = vrot.slane %v771, %v775
    %v777 = vlaneseq
    %v778 = vshrl.u32 %v777, 7
    %v779 = vsub.s32 1, %v778
    %v780 = vrot.slane %v771, %v779
    %v781 = vlaneseq
    %v782 = vshrl.u32 %v781, 7
    %v783 = vsub.s32 2, %v782
    %v784 = vrot.slane %v771, %v783
    %v788 = vmul.f32 %v711, %v776
    %v789 = vmul.f32 %v712, %v780
    %v790 = vmul.f32 %v713, %v784
    %v792 = vlaneseq
    %v793 = vshrl.u32 %v792, 7
    %v794 = vsub.s32 0, %v793
    %v795 = vrot.slane %v66, %v794
    %v796 = vlaneseq
    %v797 = vshrl.u32 %v796, 7
    %v798 = vsub.s32 1, %v797
    %v799 = vrot.slane %v66, %v798
    %v800 = vlaneseq
    %v801 = vshrl.u32 %v800, 7
    %v802 = vsub.s32 2, %v801
    %v803 = vrot.slane %v66, %v802
    %v807 = vadd.f32 %v788, %v795
    %v808 = vadd.f32 %v789, %v799
    %v809 = vadd.f32 %v790, %v803
    %v810 = vpack.c.bf16 %v807, %v807
    %v811 = vpack.c.bf16 %v808, %v808
    %v812 = vpack.c.bf16 %v809, %v809
    %v813 = vld [vmem:[#allocation6] sm:$0xf]
    %v814 = vld [vmem:[#allocation6 + $0x4] sm:$0xf]
    %v815 = vld [vmem:[#allocation6 + $0x8] sm:$0xf]
    %v816 = vld [vmem:[#allocation6 + $0xc] sm:$0xf]
    %v817 = vld [vmem:[#allocation6 + $0x10] sm:$0xf]
    %v818 = vld [vmem:[#allocation6 + $0x14] sm:$0xf]
    %v819 = vld [vmem:[#allocation6 + $0x18] sm:$0xf]
    %v820 = vld [vmem:[#allocation6 + $0x1c] sm:$0xf]
    %v821 = vld [vmem:[#allocation6 + $0x20] sm:$0xf]
    %v822 = vld [vmem:[#allocation6 + $0x24] sm:$0xf]
    %v823 = vld [vmem:[#allocation6 + $0x28] sm:$0xf]
    %v824 = vld [vmem:[#allocation6 + $0x2c] sm:$0xf]
    %v825 = vld [vmem:[#allocation6 + $0x30] sm:$0xf]
    %v826 = vld [vmem:[#allocation6 + $0x34] sm:$0xf]
    %v827 = vld [vmem:[#allocation6 + $0x38] sm:$0xf]
    %v828 = vld [vmem:[#allocation6 + $0x3c] sm:$0xf]
    %v829 = vld [vmem:[#allocation6 + $0x40] sm:$0xf]
    %v830 = vld [vmem:[#allocation6 + $0x44] sm:$0xf]
    %v831 = vld [vmem:[#allocation6 + $0x48] sm:$0xf]
    %v832 = vld [vmem:[#allocation6 + $0x4c] sm:$0xf]
    %v833 = vld [vmem:[#allocation6 + $0x50] sm:$0xf]
    %v834 = vld [vmem:[#allocation6 + $0x54] sm:$0xf]
    %v835 = vld [vmem:[#allocation6 + $0x58] sm:$0xf]
    %v836 = vld [vmem:[#allocation6 + $0x5c] sm:$0xf]
    %v837 = vld [vmem:[#allocation6 + $0x60] sm:$0xf]
    %v838 = vld [vmem:[#allocation6 + $0x64] sm:$0xf]
    %v839 = vld [vmem:[#allocation6 + $0x68] sm:$0xf]
    %v840 = vld [vmem:[#allocation6 + $0x6c] sm:$0xf]
    %v841 = vld [vmem:[#allocation6 + $0x70] sm:$0xf]
    %v842 = vld [vmem:[#allocation6 + $0x74] sm:$0xf]
    %v843 = vld [vmem:[#allocation6 + $0x78] sm:$0xf]
    %v844 = vld [vmem:[#allocation6 + $0x7c] sm:$0xf]
    %v845 = vld [vmem:[#allocation6 + $0x80] sm:$0xf]
    %v846 = vld [vmem:[#allocation6 + $0x84] sm:$0xf]
    %v847 = vld [vmem:[#allocation6 + $0x88] sm:$0xf]
    %v848 = vld [vmem:[#allocation6 + $0x8c] sm:$0xf]
    %v849 = vld [vmem:[#allocation6 + $0x90] sm:$0xf]
    %v850 = vld [vmem:[#allocation6 + $0x94] sm:$0xf]
    %v851 = vld [vmem:[#allocation6 + $0x98] sm:$0xf]
    %v852 = vld [vmem:[#allocation6 + $0x9c] sm:$0xf]
    %v853 = vld [vmem:[#allocation6 + $0xa0] sm:$0xf]
    %v854 = vld [vmem:[#allocation6 + $0xa4] sm:$0xf]
    %v855 = vld [vmem:[#allocation6 + $0xa8] sm:$0xf]
    %v856 = vld [vmem:[#allocation6 + $0xac] sm:$0xf]
    %v857 = vld [vmem:[#allocation6 + $0xb0] sm:$0xf]
    %v858 = vld [vmem:[#allocation6 + $0xb4] sm:$0xf]
    %v859 = vld [vmem:[#allocation6 + $0xb8] sm:$0xf]
    %v860 = vld [vmem:[#allocation6 + $0xbc] sm:$0xf]
    %v862 = vlaneseq
    %v863 = vshrl.u32 %v862, 7
    %v864 = vsub.s32 0, %v863
    %v865 = vrot.slane %v67, %v864
    %v915 = vunpack.c.l.b16 %v813
    %v916 = vunpack.c.l.b16 %v814
    %v917 = vunpack.c.l.b16 %v815
    %v918 = vunpack.c.l.b16 %v816
    %v919 = vunpack.c.l.b16 %v817
    %v920 = vunpack.c.l.b16 %v818
    %v921 = vunpack.c.l.b16 %v819
    %v922 = vunpack.c.l.b16 %v820
    %v923 = vunpack.c.l.b16 %v821
    %v924 = vunpack.c.l.b16 %v822
    %v925 = vunpack.c.l.b16 %v823
    %v926 = vunpack.c.l.b16 %v824
    %v927 = vunpack.c.l.b16 %v825
    %v928 = vunpack.c.l.b16 %v826
    %v929 = vunpack.c.l.b16 %v827
    %v930 = vunpack.c.l.b16 %v828
    %v931 = vunpack.c.l.b16 %v829
    %v932 = vunpack.c.l.b16 %v830
    %v933 = vunpack.c.l.b16 %v831
    %v934 = vunpack.c.l.b16 %v832
    %v935 = vunpack.c.l.b16 %v833
    %v936 = vunpack.c.l.b16 %v834
    %v937 = vunpack.c.l.b16 %v835
    %v938 = vunpack.c.l.b16 %v836
    %v939 = vunpack.c.l.b16 %v837
    %v940 = vunpack.c.l.b16 %v838
    %v941 = vunpack.c.l.b16 %v839
    %v942 = vunpack.c.l.b16 %v840
    %v943 = vunpack.c.l.b16 %v841
    %v944 = vunpack.c.l.b16 %v842
    %v945 = vunpack.c.l.b16 %v843
    %v946 = vunpack.c.l.b16 %v844
    %v947 = vunpack.c.l.b16 %v845
    %v948 = vunpack.c.l.b16 %v846
    %v949 = vunpack.c.l.b16 %v847
    %v950 = vunpack.c.l.b16 %v848
    %v951 = vunpack.c.l.b16 %v849
    %v952 = vunpack.c.l.b16 %v850
    %v953 = vunpack.c.l.b16 %v851
    %v954 = vunpack.c.l.b16 %v852
    %v955 = vunpack.c.l.b16 %v853
    %v956 = vunpack.c.l.b16 %v854
    %v957 = vunpack.c.l.b16 %v855
    %v958 = vunpack.c.l.b16 %v856
    %v959 = vunpack.c.l.b16 %v857
    %v960 = vunpack.c.l.b16 %v858
    %v961 = vunpack.c.l.b16 %v859
    %v962 = vunpack.c.l.b16 %v860
    %v963 = vpack.c.b16 %v916, %v915
    %v964 = vpack.c.b16 %v918, %v917
    %v965 = vpack.c.b16 %v920, %v919
    %v966 = vpack.c.b16 %v922, %v921
    %v967 = vpack.c.b16 %v924, %v923
    %v968 = vpack.c.b16 %v926, %v925
    %v969 = vpack.c.b16 %v928, %v927
    %v970 = vpack.c.b16 %v930, %v929
    %v971 = vpack.c.b16 %v932, %v931
    %v972 = vpack.c.b16 %v934, %v933
    %v973 = vpack.c.b16 %v936, %v935
    %v974 = vpack.c.b16 %v938, %v937
    %v975 = vpack.c.b16 %v940, %v939
    %v976 = vpack.c.b16 %v942, %v941
    %v977 = vpack.c.b16 %v944, %v943
    %v978 = vpack.c.b16 %v946, %v945
    %v979 = vpack.c.b16 %v948, %v947
    %v980 = vpack.c.b16 %v950, %v949
    %v981 = vpack.c.b16 %v952, %v951
    %v982 = vpack.c.b16 %v954, %v953
    %v983 = vpack.c.b16 %v956, %v955
    %v984 = vpack.c.b16 %v958, %v957
    %v985 = vpack.c.b16 %v960, %v959
    %v986 = vpack.c.b16 %v962, %v961
    %1011 = vmatprep.subr.bf16.mxu0 0
    %1012 = vmatpush1.bf16.msra.mxu0 %v963
    %1013 = vmatprep.subr.bf16.mxu0 0
    %1014 = vmatpush1.bf16.msra.mxu0 %v964
    %1015 = vmatprep.subr.bf16.mxu0 0
    %1016 = vmatpush1.bf16.msra.mxu0 %v965
    %1017 = vmatprep.subr.bf16.mxu0 0
    %1018 = vmatpush1.bf16.msra.mxu0 %v966
    %1019 = vmatprep.subr.bf16.mxu0 0
    %1020 = vmatpush1.bf16.msra.mxu0 %v967
    %1021 = vmatprep.subr.bf16.mxu0 0
    %1022 = vmatpush1.bf16.msra.mxu0 %v968
    %1023 = vmatprep.subr.bf16.mxu0 0
    %1024 = vmatpush1.bf16.msra.mxu0 %v969
    %1025 = vmatprep.subr.bf16.mxu0 0
    %1026 = vmatpush1.bf16.msra.mxu0 %v970
    %1027 = vmatprep.subr.bf16.mxu0 0
    %1028 = vmatpush1.bf16.msra.mxu0 %v971
    %1029 = vmatprep.subr.bf16.mxu0 0
    %1030 = vmatpush1.bf16.msra.mxu0 %v972
    %1031 = vmatprep.subr.bf16.mxu0 0
    %1032 = vmatpush1.bf16.msra.mxu0 %v973
    %1033 = vmatprep.subr.bf16.mxu0 0
    %1034 = vmatpush1.bf16.msra.mxu0 %v974
    %1035 = vmatprep.subr.bf16.mxu0 0
    %1036 = vmatpush1.bf16.msra.mxu0 %v975
    %1037 = vmatprep.subr.bf16.mxu0 0
    %1038 = vmatpush1.bf16.msra.mxu0 %v976
    %1039 = vmatprep.subr.bf16.mxu0 0
    %1040 = vmatpush1.bf16.msra.mxu0 %v977
    %1041 = vmatprep.subr.bf16.mxu0 0
    %1042 = vmatpush1.bf16.msra.mxu0 %v978
    %1043 = vmatprep.mubr.bf16.mxu0 %v811
    %1044 = vmatmul.mubr.bf16.gmra.mrb[0].mxu0 %v810
    %v1045 = vpop.f32.mrb[0].mxu0
    %v1046 = vadd.f32 %v865, %v1045
    %v1047 = vpop.f32.mrb[0].mxu0
    %v1048 = vpop.f32.mrb[0].mxu0
    %v1049 = vpop.f32.mrb[0].mxu0
    %1050 = vdwg.mxu0
    %1051 = vmatprep.subr.bf16.mxu0 0
    %1052 = vmatpush1.bf16.msra.mxu0 %v979
    %1053 = vmatprep.subr.bf16.mxu0 0
    %1054 = vmatpush1.bf16.msra.mxu0 %v980
    %1055 = vmatprep.subr.bf16.mxu0 0
    %1056 = vmatpush1.bf16.msra.mxu0 %v981
    %1057 = vmatprep.subr.bf16.mxu0 0
    %1058 = vmatpush1.bf16.msra.mxu0 %v982
    %1059 = vmatprep.subr.bf16.mxu0 0
    %1060 = vmatpush1.bf16.msra.mxu0 %v983
    %1061 = vmatprep.subr.bf16.mxu0 0
    %1062 = vmatpush1.bf16.msra.mxu0 %v984
    %1063 = vmatprep.subr.bf16.mxu0 0
    %1064 = vmatpush1.bf16.msra.mxu0 %v985
    %1065 = vmatprep.subr.bf16.mxu0 0
    %1066 = vmatpush1.bf16.msra.mxu0 %v986
    %1067 = vmatprep.subr.bf16.mxu0 0
    %1068 = vmatpush1.bf16.msra.mxu0 0
    %1069 = vmatprep.subr.bf16.mxu0 0
    %1070 = vmatpush1.bf16.msra.mxu0 0
    %1071 = vmatprep.subr.bf16.mxu0 0
    %1072 = vmatpush1.bf16.msra.mxu0 0
    %1073 = vmatprep.subr.bf16.mxu0 0
    %1074 = vmatpush1.bf16.msra.mxu0 0
    %1075 = vmatprep.subr.bf16.mxu0 0
    %1076 = vmatpush1.bf16.msra.mxu0 0
    %1077 = vmatprep.subr.bf16.mxu0 0
    %1078 = vmatpush1.bf16.msra.mxu0 0
    %1079 = vmatprep.subr.bf16.mxu0 0
    %1080 = vmatpush1.bf16.msra.mxu0 0
    %1081 = vmatprep.subr.bf16.mxu0 0
    %1082 = vmatpush1.bf16.msra.mxu0 0
    %1083 = vmatprep.mubr.bf16.mxu0 0
    %1084 = vmatmul.mubr.bf16.gmra.mrb[0].mxu0 %v812
    %v1085 = vpop.f32.mrb[0].mxu0
    %v1086 = vadd.f32 %v1046, %v1085
    %v1087 = vpop.f32.mrb[0].mxu0
    %v1088 = vpop.f32.mrb[0].mxu0
    %v1089 = vpop.f32.mrb[0].mxu0
    %1090 = vdwg.mxu0
    %1091 = vst [vmem:[%s5] sm:$0xff] %v1086
    // Predicated region
    $region34: #{encoder_forward.1} parent=1 // pred_check
      _
    $region35: #{encoder_forward.1} parent=1 // pred_check_branch
      %1093 = sbr.rel (0) target = $region37
    $region36: #{encoder_forward.1} parent=1 // pred_region
      _
    $region37: #{encoder_forward.1} parent=1 // pred_fallthru
      _
    // Predicated region
    $region38: #{encoder_forward.1} parent=1 // pred_check
      _
    $region39: #{encoder_forward.1} parent=1 // pred_check_branch
      %1095 = sbr.rel (0) target = $region41
    $region40: #{encoder_forward.1} parent=1 // pred_region
      _
    $region41: #{encoder_forward.1} parent=1 // pred_fallthru
      _
    %1096 = vsyncpa [#allocation3], 1
    %1097 = vsyncpa [#allocation5], 1

</llo_original>
